<compile_context>
chip_gen: v6e
topology: v6e:2x2x1
jax: 0.10.0
libtpu: 0.0.40
codegen_flags: <defaults>
</compile_context>

<pallas_src>
import jax
import jax.numpy as jnp
from jax.experimental import pallas as pl
from jax.experimental.pallas import tpu as pltpu

INPUT_DIM = 256
HIDDEN_DIM = 128
LATENT_DIM = 64
LATENT_PAD = 128          # lane-dense latent width used *inside* the kernel
BN_EPS = 1e-5


def _ae_kernel(x_ref,
               w1_ref, t1_ref,
               w2_ref, t2_ref,
               w3_ref, t3_ref,
               w4_ref, b4_ref,
               recon_ref, z_ref):
    # ----- encoder -----
    # Linear(256->128) + BN folded into (w1, t1); bias-add + ReLU + bf16 cast fused.
    x = x_ref[...].astype(jnp.bfloat16)        # no-op if x is already bf16
    h = jnp.dot(x, w1_ref[...], preferred_element_type=jnp.float32)
    h = jnp.maximum(h + t1_ref[...], 0.0).astype(jnp.bfloat16)
    # Dropout(0.2) == identity in eval mode.

    # Linear(128->64) + BN folded; computed 128-lane padded (extra cols are exactly 0).
    zp = jnp.dot(h, w2_ref[...], preferred_element_type=jnp.float32) + t2_ref[...]
    # Store only the 64 real latent columns (minor output; masked vst accepted).
    z_ref[...] = zp[:, :LATENT_DIM].astype(z_ref.dtype)

    # ----- decoder -----
    # Linear(64->128) + BN folded (padded latent rows of w3 are zero); ReLU.
    d = jnp.dot(zp.astype(jnp.bfloat16), w3_ref[...],
                preferred_element_type=jnp.float32)
    d = jnp.maximum(d + t3_ref[...], 0.0).astype(jnp.bfloat16)

    # Linear(128->256); Dropout == identity.
    recon = jnp.dot(d, w4_ref[...], preferred_element_type=jnp.float32) + b4_ref[...]
    recon_ref[...] = recon.astype(recon_ref.dtype)


def fold_params(params):
    """Constant-fold Linear bias + BN affine into the weights (free at prep time)."""
    (w1, b1, s1, t1,
     w2, b2, s2, t2,
     w3, b3, s3, t3,
     w4, b4) = params

    # y = (x@w + b) * s + t  ==  x @ (w*s) + (b*s + t)
    w1f = (w1 * s1).astype(jnp.bfloat16)
    t1f = (b1 * s1 + t1).astype(jnp.float32)

    w2f = w2 * s2
    t2f = b2 * s2 + t2
    # zero-pad latent dim 64 -> 128 (extra z columns are exactly zero)
    w2p = jnp.zeros((HIDDEN_DIM, LATENT_PAD), jnp.float32)
    w2p = w2p.at[:, :LATENT_DIM].set(w2f).astype(jnp.bfloat16)
    t2p = jnp.zeros((1, LATENT_PAD), jnp.float32).at[:, :LATENT_DIM].set(t2f)

    w3f = w3 * s3
    t3f = (b3 * s3 + t3).astype(jnp.float32)
    # zero rows for the padded latent inputs -> padded z columns contribute 0
    w3p = jnp.zeros((LATENT_PAD, HIDDEN_DIM), jnp.float32)
    w3p = w3p.at[:LATENT_DIM, :].set(w3f).astype(jnp.bfloat16)

    w4f = w4.astype(jnp.bfloat16)
    b4f = b4.astype(jnp.float32)

    return (w1f, t1f, w2p, t2p, w3p, t3f, w4f, b4f)


def autoencoder_forward(x, params, *, tb=1024, out_dtype=jnp.bfloat16):
    """x: [B, INPUT_DIM] (f32 or bf16). Returns (x_recon [B,256], z [B,64]) in out_dtype."""
    B = x.shape[0]
    folded = fold_params(params)

    # Batch tile: multiple of 8 sublanes.  No host-side zero-pad copy of x —
    # a ragged last block (if any) is handled by Pallas' masked edge stores,
    # and its garbage rows never feed any cross-row reduction.
    b_al = ((B + 7) // 8) * 8
    tb_eff = min(tb, b_al)
    grid = (pl.cdiv(B, tb_eff),)

    def resident(a):
        # weights / shifts: same block every grid step -> stays VMEM-resident
        return pl.BlockSpec(a.shape, lambda i: (0, 0))

    in_specs = [pl.BlockSpec((tb_eff, INPUT_DIM), lambda i: (i, 0))]
    in_specs += [resident(a) for a in folded]

    out_specs = (
        pl.BlockSpec((tb_eff, INPUT_DIM), lambda i: (i, 0)),
        pl.BlockSpec((tb_eff, LATENT_DIM), lambda i: (i, 0)),  # last dim == full dim
    )
    out_shape = (
        jax.ShapeDtypeStruct((B, INPUT_DIM), out_dtype),   # x_recon (bf16 by default)
        jax.ShapeDtypeStruct((B, LATENT_DIM), out_dtype),  # z, unpadded: no epilogue slice
    )

    out_isz = jnp.dtype(out_dtype).itemsize
    flops = 2 * B * (INPUT_DIM * HIDDEN_DIM + HIDDEN_DIM * LATENT_PAD
                     + LATENT_PAD * HIDDEN_DIM + HIDDEN_DIM * INPUT_DIM)
    bytes_accessed = (B * INPUT_DIM * x.dtype.itemsize      # x in
                      + B * INPUT_DIM * out_isz             # recon out
                      + B * LATENT_DIM * out_isz            # z out
                      + sum(int(a.size) * a.dtype.itemsize for a in folded))
    cost = pl.CostEstimate(flops=flops, transcendentals=0,
                           bytes_accessed=bytes_accessed)

    recon, z = pl.pallas_call(
        _ae_kernel,
        grid=grid,
        in_specs=in_specs,
        out_specs=out_specs,
        out_shape=out_shape,
        compiler_params=pltpu.CompilerParams(
            dimension_semantics=("parallel",),          # shard batch across TCs (v7x)
            vmem_limit_bytes=32 * 1024 * 1024),         # ~8 MiB used at tb=1024
        cost_estimate=cost,
    )(x, *folded)

    return recon, z


def init_params(key):
    """Deterministic parameter init matching the nn.Module's shapes."""
    ks = jax.random.split(key, 8)

    def linear(kw, kb, fan_in, fan_out):
        bound = 1.0 / jnp.sqrt(fan_in)
        w = jax.random.uniform(kw, (fan_in, fan_out), jnp.float32, -bound, bound)
        b = jax.random.uniform(kb, (1, fan_out), jnp.float32, -bound, bound)
        return w, b

    w1, b1 = linear(ks[0], ks[1], INPUT_DIM, HIDDEN_DIM)
    w2, b2 = linear(ks[2], ks[3], HIDDEN_DIM, LATENT_DIM)
    w3, b3 = linear(ks[4], ks[5], LATENT_DIM, HIDDEN_DIM)
    w4, b4 = linear(ks[6], ks[7], HIDDEN_DIM, INPUT_DIM)

    def bn_fold(n):
        # PyTorch BatchNorm1d init: gamma=1, beta=0, running_mean=0, running_var=1
        gamma = jnp.ones((1, n), jnp.float32)
        beta = jnp.zeros((1, n), jnp.float32)
        running_mean = jnp.zeros((1, n), jnp.float32)
        running_var = jnp.ones((1, n), jnp.float32)
        scale = gamma / jnp.sqrt(running_var + BN_EPS)
        shift = beta - running_mean * scale
        return scale, shift

    s1, t1 = bn_fold(HIDDEN_DIM)   # encoder BN(128)
    s2, t2 = bn_fold(LATENT_DIM)   # encoder BN(64)
    s3, t3 = bn_fold(HIDDEN_DIM)   # decoder BN(128)

    return (w1, b1, s1, t1,
            w2, b2, s2, t2,
            w3, b3, s3, t3,
            w4, b4)


def reference_forward(x, params):
    """Pure-JAX f32 reference (eval-mode) for a sanity check."""
    (w1, b1, s1, t1, w2, b2, s2, t2, w3, b3, s3, t3, w4, b4) = params
    h = jnp.maximum((x @ w1 + b1) * s1 + t1, 0.0)
    z = (h @ w2 + b2) * s2 + t2
    d = jnp.maximum((z @ w3 + b3) * s3 + t3, 0.0)
    recon = d @ w4 + b4
    return recon, z


if __name__ == "__main__":
    key = jax.random.PRNGKey(0)
    kx, kp = jax.random.split(key)

    batch = 8
    x = jax.random.normal(kx, (batch, INPUT_DIM), jnp.float32)
    params = init_params(kp)

    x_recon, z = autoencoder_forward(x, params)
    jax.block_until_ready((x_recon, z))

    ref_recon, ref_z = reference_forward(x, params)
    assert x_recon.shape == (batch, INPUT_DIM)
    assert z.shape == (batch, LATENT_DIM)
    # bf16 weights + bf16 outputs (f32 accumulation) vs f32 reference:
    # relaxed tolerance — intentional inference-precision choice.
    assert jnp.allclose(x_recon.astype(jnp.float32), ref_recon, atol=5e-2, rtol=5e-2)
    assert jnp.allclose(z.astype(jnp.float32), ref_z, atol=5e-2, rtol=5e-2)

    print("KERNEL_OK")
</pallas_src>

<mosaic_0001>
module attributes {stable_mosaic.version = 11 : i64} {
  func.func @_ae_kernel(%arg0: i32, %arg1: memref<8x256xf32, #tpu.memory_space<vmem>>, %arg2: memref<256x128xbf16, #tpu.memory_space<vmem>>, %arg3: memref<1x128xf32, #tpu.memory_space<vmem>>, %arg4: memref<128x128xbf16, #tpu.memory_space<vmem>>, %arg5: memref<1x128xf32, #tpu.memory_space<vmem>>, %arg6: memref<128x128xbf16, #tpu.memory_space<vmem>>, %arg7: memref<1x128xf32, #tpu.memory_space<vmem>>, %arg8: memref<128x256xbf16, #tpu.memory_space<vmem>>, %arg9: memref<1x256xf32, #tpu.memory_space<vmem>>, %arg10: memref<8x256xbf16, #tpu.memory_space<vmem>>, %arg11: memref<8x64xbf16, #tpu.memory_space<vmem>>) attributes {dimension_semantics = [#tpu.dimension_semantics<parallel>], iteration_bounds = array<i64: 1>, scalar_prefetch = 0 : i64, scratch_operands = 0 : i64, tpu.core_type = #tpu.core_type<tc>, window_params = [{transform_indices = @transform_0, window_bounds = array<i64: 8, 256>}, {pipeline_mode = #tpu.pipeline_mode<synchronous>, transform_indices = @transform_1, window_bounds = array<i64: 256, 128>}, {pipeline_mode = #tpu.pipeline_mode<synchronous>, transform_indices = @transform_2, window_bounds = array<i64: 1, 128>}, {pipeline_mode = #tpu.pipeline_mode<synchronous>, transform_indices = @transform_3, window_bounds = array<i64: 128, 128>}, {pipeline_mode = #tpu.pipeline_mode<synchronous>, transform_indices = @transform_4, window_bounds = array<i64: 1, 128>}, {pipeline_mode = #tpu.pipeline_mode<synchronous>, transform_indices = @transform_5, window_bounds = array<i64: 128, 128>}, {pipeline_mode = #tpu.pipeline_mode<synchronous>, transform_indices = @transform_6, window_bounds = array<i64: 1, 128>}, {pipeline_mode = #tpu.pipeline_mode<synchronous>, transform_indices = @transform_7, window_bounds = array<i64: 128, 256>}, {pipeline_mode = #tpu.pipeline_mode<synchronous>, transform_indices = @transform_8, window_bounds = array<i64: 1, 256>}, {transform_indices = @transform_9, window_bounds = array<i64: 8, 256>}, {transform_indices = @transform_10, window_bounds = array<i64: 8, 64>}]} {
    %c0 = arith.constant 0 : index
    %c0_0 = arith.constant 0 : index
    %0 = vector.load %arg1[%c0, %c0_0] : memref<8x256xf32, #tpu.memory_space<vmem>>, vector<8x256xf32>
    %1 = arith.truncf %0 : vector<8x256xf32> to vector<8x256xbf16>
    %c0_1 = arith.constant 0 : index
    %c0_2 = arith.constant 0 : index
    %2 = vector.load %arg2[%c0_1, %c0_2] : memref<256x128xbf16, #tpu.memory_space<vmem>>, vector<256x128xbf16>
    %cst = arith.constant dense<0.000000e+00> : vector<8x128xf32>
    %3 = tpu.matmul %1, %2, %cst {dimension_numbers = #tpu.dot_dimension_numbers<[1], [0], [0], [1], [0, 0, 1, 1], [], []>} : vector<8x256xbf16>, vector<256x128xbf16>, vector<8x128xf32> -> vector<8x128xf32>
    %c0_3 = arith.constant 0 : index
    %c0_4 = arith.constant 0 : index
    %4 = vector.load %arg3[%c0_3, %c0_4] : memref<1x128xf32, #tpu.memory_space<vmem>>, vector<1x128xf32>
    %5 = vector.broadcast %4 : vector<1x128xf32> to vector<8x128xf32>
    %6 = arith.addf %3, %5 : vector<8x128xf32>
    %cst_5 = arith.constant 0.000000e+00 : f32
    %7 = vector.broadcast %cst_5 : f32 to vector<8x128xf32>
    %8 = arith.maximumf %6, %7 : vector<8x128xf32>
    %9 = arith.truncf %8 : vector<8x128xf32> to vector<8x128xbf16>
    %c0_6 = arith.constant 0 : index
    %c0_7 = arith.constant 0 : index
    %10 = vector.load %arg4[%c0_6, %c0_7] : memref<128x128xbf16, #tpu.memory_space<vmem>>, vector<128x128xbf16>
    %cst_8 = arith.constant dense<0.000000e+00> : vector<8x128xf32>
    %11 = tpu.matmul %9, %10, %cst_8 {dimension_numbers = #tpu.dot_dimension_numbers<[1], [0], [0], [1], [0, 0, 1, 1], [], []>} : vector<8x128xbf16>, vector<128x128xbf16>, vector<8x128xf32> -> vector<8x128xf32>
    %c0_9 = arith.constant 0 : index
    %c0_10 = arith.constant 0 : index
    %12 = vector.load %arg5[%c0_9, %c0_10] : memref<1x128xf32, #tpu.memory_space<vmem>>, vector<1x128xf32>
    %13 = vector.broadcast %12 : vector<1x128xf32> to vector<8x128xf32>
    %14 = arith.addf %11, %13 : vector<8x128xf32>
    %15 = vector.extract_strided_slice %14 {offsets = [0, 0], sizes = [8, 64], strides = [1, 1]} : vector<8x128xf32> to vector<8x64xf32>
    %16 = arith.truncf %15 : vector<8x64xf32> to vector<8x64xbf16>
    %c0_11 = arith.constant 0 : index
    %c0_12 = arith.constant 0 : index
    %17 = vector.load %arg11[%c0_11, %c0_12] : memref<8x64xbf16, #tpu.memory_space<vmem>>, vector<8x64xbf16>
    tpu.vector_store %arg11[%c0_11, %c0_12], %16 {strides = array<i32>} : memref<8x64xbf16, #tpu.memory_space<vmem>>, vector<8x64xbf16>,
    %18 = arith.truncf %14 : vector<8x128xf32> to vector<8x128xbf16>
    %c0_13 = arith.constant 0 : index
    %c0_14 = arith.constant 0 : index
    %19 = vector.load %arg6[%c0_13, %c0_14] : memref<128x128xbf16, #tpu.memory_space<vmem>>, vector<128x128xbf16>
    %cst_15 = arith.constant dense<0.000000e+00> : vector<8x128xf32>
    %20 = tpu.matmul %18, %19, %cst_15 {dimension_numbers = #tpu.dot_dimension_numbers<[1], [0], [0], [1], [0, 0, 1, 1], [], []>} : vector<8x128xbf16>, vector<128x128xbf16>, vector<8x128xf32> -> vector<8x128xf32>
    %c0_16 = arith.constant 0 : index
    %c0_17 = arith.constant 0 : index
    %21 = vector.load %arg7[%c0_16, %c0_17] : memref<1x128xf32, #tpu.memory_space<vmem>>, vector<1x128xf32>
    %22 = vector.broadcast %21 : vector<1x128xf32> to vector<8x128xf32>
    %23 = arith.addf %20, %22 : vector<8x128xf32>
    %cst_18 = arith.constant 0.000000e+00 : f32
    %24 = vector.broadcast %cst_18 : f32 to vector<8x128xf32>
    %25 = arith.maximumf %23, %24 : vector<8x128xf32>
    %26 = arith.truncf %25 : vector<8x128xf32> to vector<8x128xbf16>
    %c0_19 = arith.constant 0 : index
    %c0_20 = arith.constant 0 : index
    %27 = vector.load %arg8[%c0_19, %c0_20] : memref<128x256xbf16, #tpu.memory_space<vmem>>, vector<128x256xbf16>
    %cst_21 = arith.constant dense<0.000000e+00> : vector<8x256xf32>
    %28 = tpu.matmul %26, %27, %cst_21 {dimension_numbers = #tpu.dot_dimension_numbers<[1], [0], [0], [1], [0, 0, 1, 1], [], []>} : vector<8x128xbf16>, vector<128x256xbf16>, vector<8x256xf32> -> vector<8x256xf32>
    %c0_22 = arith.constant 0 : index
    %c0_23 = arith.constant 0 : index
    %29 = vector.load %arg9[%c0_22, %c0_23] : memref<1x256xf32, #tpu.memory_space<vmem>>, vector<1x256xf32>
    %30 = vector.broadcast %29 : vector<1x256xf32> to vector<8x256xf32>
    %31 = arith.addf %28, %30 : vector<8x256xf32>
    %32 = arith.truncf %31 : vector<8x256xf32> to vector<8x256xbf16>
    %c0_24 = arith.constant 0 : index
    %c0_25 = arith.constant 0 : index
    %33 = vector.load %arg10[%c0_24, %c0_25] : memref<8x256xbf16, #tpu.memory_space<vmem>>, vector<8x256xbf16>
    tpu.vector_store %arg10[%c0_24, %c0_25], %32 {strides = array<i32>} : memref<8x256xbf16, #tpu.memory_space<vmem>>, vector<8x256xbf16>,
    return
  }
  func.func @transform_0(%arg0: i32) -> (i32, i32) {
    %c0_i32 = arith.constant 0 : i32
    %c0_i32_0 = arith.constant 0 : i32
    return %arg0, %c0_i32 : i32, i32
  }
  func.func @transform_1(%arg0: i32) -> (i32, i32) {
    %c0_i32 = arith.constant 0 : i32
    %c0_i32_0 = arith.constant 0 : i32
    %c0_i32_1 = arith.constant 0 : i32
    return %c0_i32, %c0_i32_0 : i32, i32
  }
  func.func @transform_2(%arg0: i32) -> (i32, i32) {
    %c0_i32 = arith.constant 0 : i32
    %c0_i32_0 = arith.constant 0 : i32
    %c0_i32_1 = arith.constant 0 : i32
    return %c0_i32, %c0_i32_0 : i32, i32
  }
  func.func @transform_3(%arg0: i32) -> (i32, i32) {
    %c0_i32 = arith.constant 0 : i32
    %c0_i32_0 = arith.constant 0 : i32
    %c0_i32_1 = arith.constant 0 : i32
    return %c0_i32, %c0_i32_0 : i32, i32
  }
  func.func @transform_4(%arg0: i32) -> (i32, i32) {
    %c0_i32 = arith.constant 0 : i32
    %c0_i32_0 = arith.constant 0 : i32
    %c0_i32_1 = arith.constant 0 : i32
    return %c0_i32, %c0_i32_0 : i32, i32
  }
  func.func @transform_5(%arg0: i32) -> (i32, i32) {
    %c0_i32 = arith.constant 0 : i32
    %c0_i32_0 = arith.constant 0 : i32
    %c0_i32_1 = arith.constant 0 : i32
    return %c0_i32, %c0_i32_0 : i32, i32
  }
  func.func @transform_6(%arg0: i32) -> (i32, i32) {
    %c0_i32 = arith.constant 0 : i32
    %c0_i32_0 = arith.constant 0 : i32
    %c0_i32_1 = arith.constant 0 : i32
    return %c0_i32, %c0_i32_0 : i32, i32
  }
  func.func @transform_7(%arg0: i32) -> (i32, i32) {
    %c0_i32 = arith.constant 0 : i32
    %c0_i32_0 = arith.constant 0 : i32
    %c0_i32_1 = arith.constant 0 : i32
    return %c0_i32, %c0_i32_0 : i32, i32
  }
  func.func @transform_8(%arg0: i32) -> (i32, i32) {
    %c0_i32 = arith.constant 0 : i32
    %c0_i32_0 = arith.constant 0 : i32
    %c0_i32_1 = arith.constant 0 : i32
    return %c0_i32, %c0_i32_0 : i32, i32
  }
  func.func @transform_9(%arg0: i32) -> (i32, i32) {
    %c0_i32 = arith.constant 0 : i32
    %c0_i32_0 = arith.constant 0 : i32
    return %arg0, %c0_i32 : i32, i32
  }
  func.func @transform_10(%arg0: i32) -> (i32, i32) {
    %c0_i32 = arith.constant 0 : i32
    %c0_i32_0 = arith.constant 0 : i32
    return %arg0, %c0_i32 : i32, i32
  }
}

</mosaic_0001>

<llo_original>
// kernel: tpu_custom_call.1
$region0: #{tpu_custom_call.1}
  #allocation0 [shape = 'u32[]', space=smem, size = 0x4, offset = 0x4, fixed_abs, tag = 'smem constant byte address 0x4 - core index']
  #allocation1 [shape = 'u32[144,128]{1,0:T(1,128)}', space=vmem, size = 0x12000, scoped, tag = 'internal scratch']
  %s0 = inlined_call_operand.hbm [shape: f32[8,256], index: 0, kind: input, shape index: {}]
  %s1 = inlined_call_operand.hbm [shape: bf16[256,128], index: 1, kind: input, shape index: {}]
  %s2 = inlined_call_operand.vmem [shape: f32[1,128], index: 2, kind: input, shape index: {}]
  %s3 = inlined_call_operand.hbm [shape: bf16[128,128], index: 3, kind: input, shape index: {}]
  %s4 = inlined_call_operand.vmem [shape: f32[1,128], index: 4, kind: input, shape index: {}]
  %s5 = inlined_call_operand.hbm [shape: bf16[128,128], index: 5, kind: input, shape index: {}]
  %s6 = inlined_call_operand.vmem [shape: f32[1,128], index: 6, kind: input, shape index: {}]
  %s7 = inlined_call_operand.hbm [shape: bf16[128,256], index: 7, kind: input, shape index: {}]
  %s8 = inlined_call_operand.vmem [shape: f32[1,256], index: 8, kind: input, shape index: {}]
  %s9 = inlined_call_operand.hbm [shape: bf16[8,256], index: 9, kind: output, shape index: {0}]
  %s10 = inlined_call_operand.hbm [shape: bf16[8,64], index: 10, kind: output, shape index: {1}]
  %11 = xla_tuple %s9, %s10
  %s12 = sld [smem:[#allocation0]]
  $region74: #{tpu_custom_call.1} parent=0
    _
  %s14 = ssub.s32 1, %s12
  %s15 = scalar_select 0, %s14, %s12
  $region1: #{tpu_custom_call.1} parent=0
    #allocation2 [shape = 'u8[8192]{0}', space=vmem, size = 0x2000, scoped, tag = 'input window, operand 0, single buffered']
    #allocation3 [shape = 's32[1]{0}', space=sflag, size = 0x4, scoped, tag = 'scoped memory for tpu_custom_call.1']
    #allocation4 [shape = 's32[1]{0}', space=sflag, size = 0x4, scoped, tag = 'scoped memory for tpu_custom_call.1']
    #allocation5 [shape = 'u8[65536]{0}', space=vmem, size = 0x10000, scoped, tag = 'input window, operand 1, single buffered']
    #allocation6 [shape = 's32[1]{0}', space=sflag, size = 0x4, scoped, tag = 'scoped memory for tpu_custom_call.1']
    #allocation7 [shape = 'u8[32768]{0}', space=vmem, size = 0x8000, scoped, tag = 'input window, operand 3, single buffered']
    #allocation8 [shape = 'u8[32768]{0}', space=vmem, size = 0x8000, scoped, tag = 'input window, operand 5, single buffered']
    #allocation9 [shape = 's32[1]{0}', space=sflag, size = 0x4, scoped, tag = 'scoped memory for tpu_custom_call.1']
    #allocation10 [shape = 'u8[65536]{0}', space=vmem, size = 0x10000, scoped, tag = 'input window, operand 7, single buffered']
    #allocation11 [shape = 'u8[4096]{0}', space=vmem, size = 0x1000, scoped, tag = 'output window, operand 0, single buffered']
    #allocation12 [shape = 'u8[2048]{0}', space=vmem, size = 0x800, scoped, tag = 'output window, operand 1, single buffered']
    #allocation13 [shape = 's32[1]{0}', space=sflag, size = 0x4, scoped, tag = 'scoped memory for tpu_custom_call.1']
    %16 = vsyncpa [#allocation3], 0
    %17 = vsyncpa [#allocation6], 0
    %18 = vsyncpa [#allocation9], 0
    %19 = vsyncpa [#allocation4], 0
    %20 = vsyncpa [#allocation13], 0
    // Predicated region
    $region2: #{tpu_custom_call.1} parent=1 // pred_check
      _
    $region3: #{tpu_custom_call.1} parent=1 // pred_check_branch
      %22 = sbr.rel (0) target = $region5
    $region4: #{tpu_custom_call.1} parent=1 // pred_region
      %s24 = ssub.s32 256, 256
      %25 = vsyncadd [#allocation3], %s24
      %s27 = sshll.u32 [#allocation2], 4
      %s28 = int_to_ptr.vmem [resolvable:$true] %s27
      %30 = dma.hbm_to_vmem [thread:$0]  %s0, 256, %s28, [#allocation3]
    $region5: #{tpu_custom_call.1} parent=1 // pred_fallthru
      _
    // Predicated region
    $region6: #{tpu_custom_call.1} parent=1 // pred_check
      _
    $region7: #{tpu_custom_call.1} parent=1 // pred_check_branch
      %32 = sbr.rel (0) target = $region9
    $region8: #{tpu_custom_call.1} parent=1 // pred_region
      %s34 = ssub.s32 2048, 2048
      %35 = vsyncadd [#allocation6], %s34
      %s36 = sshll.u32 [#allocation5], 4
      %s37 = int_to_ptr.vmem [resolvable:$true] %s36
      %42 = dma.hbm_to_vmem [thread:$0]  %s1, 2048, %s37, [#allocation6], 64, 64, 4
    $region9: #{tpu_custom_call.1} parent=1 // pred_fallthru
      _
    // Predicated region
    $region10: #{tpu_custom_call.1} parent=1 // pred_check
      _
    $region11: #{tpu_custom_call.1} parent=1 // pred_check_branch
      %44 = sbr.rel (0) target = $region13
    $region12: #{tpu_custom_call.1} parent=1 // pred_region
      _
    $region13: #{tpu_custom_call.1} parent=1 // pred_fallthru
      _
    // Predicated region
    $region14: #{tpu_custom_call.1} parent=1 // pred_check
      _
    $region15: #{tpu_custom_call.1} parent=1 // pred_check_branch
      %46 = sbr.rel (0) target = $region17
    $region16: #{tpu_custom_call.1} parent=1 // pred_region
      %s48 = ssub.s32 1024, 1024
      %49 = vsyncadd [#allocation6], %s48
      %s50 = sshll.u32 [#allocation7], 4
      %s51 = int_to_ptr.vmem [resolvable:$true] %s50
      %56 = dma.hbm_to_vmem [thread:$0]  %s3, 1024, %s51, [#allocation6], 64, 64, 4
    $region17: #{tpu_custom_call.1} parent=1 // pred_fallthru
      _
    // Predicated region
    $region18: #{tpu_custom_call.1} parent=1 // pred_check
      _
    $region19: #{tpu_custom_call.1} parent=1 // pred_check_branch
      %58 = sbr.rel (0) target = $region21
    $region20: #{tpu_custom_call.1} parent=1 // pred_region
      _
    $region21: #{tpu_custom_call.1} parent=1 // pred_fallthru
      _
    // Predicated region
    $region22: #{tpu_custom_call.1} parent=1 // pred_check
      _
    $region23: #{tpu_custom_call.1} parent=1 // pred_check_branch
      %60 = sbr.rel (0) target = $region25
    $region24: #{tpu_custom_call.1} parent=1 // pred_region
      %s62 = ssub.s32 1024, 1024
      %63 = vsyncadd [#allocation9], %s62
      %s64 = sshll.u32 [#allocation8], 4
      %s65 = int_to_ptr.vmem [resolvable:$true] %s64
      %70 = dma.hbm_to_vmem [thread:$0]  %s5, 1024, %s65, [#allocation9], 64, 64, 4
    $region25: #{tpu_custom_call.1} parent=1 // pred_fallthru
      _
    // Predicated region
    $region26: #{tpu_custom_call.1} parent=1 // pred_check
      _
    $region27: #{tpu_custom_call.1} parent=1 // pred_check_branch
      %72 = sbr.rel (0) target = $region29
    $region28: #{tpu_custom_call.1} parent=1 // pred_region
      _
    $region29: #{tpu_custom_call.1} parent=1 // pred_fallthru
      _
    // Predicated region
    $region30: #{tpu_custom_call.1} parent=1 // pred_check
      _
    $region31: #{tpu_custom_call.1} parent=1 // pred_check_branch
      %74 = sbr.rel (0) target = $region33
    $region32: #{tpu_custom_call.1} parent=1 // pred_region
      %s76 = ssub.s32 2048, 2048
      %77 = vsyncadd [#allocation9], %s76
      %s78 = sshll.u32 [#allocation10], 4
      %s79 = int_to_ptr.vmem [resolvable:$true] %s78
      %84 = dma.hbm_to_vmem [thread:$0]  %s7, 2048, %s79, [#allocation9], 128, 128, 8
    $region33: #{tpu_custom_call.1} parent=1 // pred_fallthru
      _
    // Predicated region
    $region34: #{tpu_custom_call.1} parent=1 // pred_check
      _
    $region35: #{tpu_custom_call.1} parent=1 // pred_check_branch
      %86 = sbr.rel (0) target = $region37
    $region36: #{tpu_custom_call.1} parent=1 // pred_region
      _
    $region37: #{tpu_custom_call.1} parent=1 // pred_fallthru
      _
    // Predicated region
    $region38: #{tpu_custom_call.1} parent=1 // pred_check
      _
    $region39: #{tpu_custom_call.1} parent=1 // pred_check_branch
      %88 = sbr.rel (0) target = $region41
    $region40: #{tpu_custom_call.1} parent=1 // pred_region
      %89 = dma.done [#allocation3], 256
    $region41: #{tpu_custom_call.1} parent=1 // pred_fallthru
      _
    // Predicated region
    $region42: #{tpu_custom_call.1} parent=1 // pred_check
      _
    $region43: #{tpu_custom_call.1} parent=1 // pred_check_branch
      %91 = sbr.rel (0) target = $region45
    $region44: #{tpu_custom_call.1} parent=1 // pred_region
      %92 = dma.done [#allocation6], 2048
    $region45: #{tpu_custom_call.1} parent=1 // pred_fallthru
      _
    // Predicated region
    $region46: #{tpu_custom_call.1} parent=1 // pred_check
      _
    $region47: #{tpu_custom_call.1} parent=1 // pred_check_branch
      %94 = sbr.rel (0) target = $region49
    $region48: #{tpu_custom_call.1} parent=1 // pred_region
      %95 = dma.done [#allocation6], 1024
    $region49: #{tpu_custom_call.1} parent=1 // pred_fallthru
      _
    // Predicated region
    $region50: #{tpu_custom_call.1} parent=1 // pred_check
      _
    $region51: #{tpu_custom_call.1} parent=1 // pred_check_branch
      %97 = sbr.rel (0) target = $region53
    $region52: #{tpu_custom_call.1} parent=1 // pred_region
      %98 = dma.done [#allocation9], 1024
    $region53: #{tpu_custom_call.1} parent=1 // pred_fallthru
      _
    // Predicated region
    $region54: #{tpu_custom_call.1} parent=1 // pred_check
      _
    $region55: #{tpu_custom_call.1} parent=1 // pred_check_branch
      %100 = sbr.rel (0) target = $region57
    $region56: #{tpu_custom_call.1} parent=1 // pred_region
      %101 = dma.done [#allocation9], 2048
    $region57: #{tpu_custom_call.1} parent=1 // pred_fallthru
      _
    %v103 = vld [vmem:[#allocation2] sm:$0xff]
    %v104 = vld [vmem:[#allocation2 + $0x8] sm:$0xff]
    %v105 = vpack.c.bf16 %v103, %v103
    %v106 = vpack.c.bf16 %v104, %v104
    %v107 = vld [vmem:[#allocation5] sm:$0xf]
    %v108 = vld [vmem:[#allocation5 + $0x4] sm:$0xf]
    %v109 = vld [vmem:[#allocation5 + $0x8] sm:$0xf]
    %v110 = vld [vmem:[#allocation5 + $0xc] sm:$0xf]
    %v111 = vld [vmem:[#allocation5 + $0x10] sm:$0xf]
    %v112 = vld [vmem:[#allocation5 + $0x14] sm:$0xf]
    %v113 = vld [vmem:[#allocation5 + $0x18] sm:$0xf]
    %v114 = vld [vmem:[#allocation5 + $0x1c] sm:$0xf]
    %v115 = vld [vmem:[#allocation5 + $0x20] sm:$0xf]
    %v116 = vld [vmem:[#allocation5 + $0x24] sm:$0xf]
    %v117 = vld [vmem:[#allocation5 + $0x28] sm:$0xf]
    %v118 = vld [vmem:[#allocation5 + $0x2c] sm:$0xf]
    %v119 = vld [vmem:[#allocation5 + $0x30] sm:$0xf]
    %v120 = vld [vmem:[#allocation5 + $0x34] sm:$0xf]
    %v121 = vld [vmem:[#allocation5 + $0x38] sm:$0xf]
    %v122 = vld [vmem:[#allocation5 + $0x3c] sm:$0xf]
    %v123 = vld [vmem:[#allocation5 + $0x40] sm:$0xf]
    %v124 = vld [vmem:[#allocation5 + $0x44] sm:$0xf]
    %v125 = vld [vmem:[#allocation5 + $0x48] sm:$0xf]
    %v126 = vld [vmem:[#allocation5 + $0x4c] sm:$0xf]
    %v127 = vld [vmem:[#allocation5 + $0x50] sm:$0xf]
    %v128 = vld [vmem:[#allocation5 + $0x54] sm:$0xf]
    %v129 = vld [vmem:[#allocation5 + $0x58] sm:$0xf]
    %v130 = vld [vmem:[#allocation5 + $0x5c] sm:$0xf]
    %v131 = vld [vmem:[#allocation5 + $0x60] sm:$0xf]
    %v132 = vld [vmem:[#allocation5 + $0x64] sm:$0xf]
    %v133 = vld [vmem:[#allocation5 + $0x68] sm:$0xf]
    %v134 = vld [vmem:[#allocation5 + $0x6c] sm:$0xf]
    %v135 = vld [vmem:[#allocation5 + $0x70] sm:$0xf]
    %v136 = vld [vmem:[#allocation5 + $0x74] sm:$0xf]
    %v137 = vld [vmem:[#allocation5 + $0x78] sm:$0xf]
    %v138 = vld [vmem:[#allocation5 + $0x7c] sm:$0xf]
    %v139 = vld [vmem:[%s2] sm:$0x1]
    %v141 = vlaneseq
    %v142 = vshrl.u32 %v141, 7
    %v143 = vsub.s32 0, %v142
    %v144 = vrot.slane %v139, %v143
    %v178 = vunpack.c.l.b16 %v107
    %v179 = vunpack.c.l.b16 %v108
    %v180 = vunpack.c.l.b16 %v109
    %v181 = vunpack.c.l.b16 %v110
    %v182 = vunpack.c.l.b16 %v111
    %v183 = vunpack.c.l.b16 %v112
    %v184 = vunpack.c.l.b16 %v113
    %v185 = vunpack.c.l.b16 %v114
    %v186 = vunpack.c.l.b16 %v115
    %v187 = vunpack.c.l.b16 %v116
    %v188 = vunpack.c.l.b16 %v117
    %v189 = vunpack.c.l.b16 %v118
    %v190 = vunpack.c.l.b16 %v119
    %v191 = vunpack.c.l.b16 %v120
    %v192 = vunpack.c.l.b16 %v121
    %v193 = vunpack.c.l.b16 %v122
    %v194 = vunpack.c.l.b16 %v123
    %v195 = vunpack.c.l.b16 %v124
    %v196 = vunpack.c.l.b16 %v125
    %v197 = vunpack.c.l.b16 %v126
    %v198 = vunpack.c.l.b16 %v127
    %v199 = vunpack.c.l.b16 %v128
    %v200 = vunpack.c.l.b16 %v129
    %v201 = vunpack.c.l.b16 %v130
    %v202 = vunpack.c.l.b16 %v131
    %v203 = vunpack.c.l.b16 %v132
    %v204 = vunpack.c.l.b16 %v133
    %v205 = vunpack.c.l.b16 %v134
    %v206 = vunpack.c.l.b16 %v135
    %v207 = vunpack.c.l.b16 %v136
    %v208 = vunpack.c.l.b16 %v137
    %v209 = vunpack.c.l.b16 %v138
    %v210 = vpack.c.b16 %v179, %v178
    %v211 = vpack.c.b16 %v181, %v180
    %v212 = vpack.c.b16 %v183, %v182
    %v213 = vpack.c.b16 %v185, %v184
    %v214 = vpack.c.b16 %v187, %v186
    %v215 = vpack.c.b16 %v189, %v188
    %v216 = vpack.c.b16 %v191, %v190
    %v217 = vpack.c.b16 %v193, %v192
    %v218 = vpack.c.b16 %v195, %v194
    %v219 = vpack.c.b16 %v197, %v196
    %v220 = vpack.c.b16 %v199, %v198
    %v221 = vpack.c.b16 %v201, %v200
    %v222 = vpack.c.b16 %v203, %v202
    %v223 = vpack.c.b16 %v205, %v204
    %v224 = vpack.c.b16 %v207, %v206
    %v225 = vpack.c.b16 %v209, %v208
    %242 = vmatprep.subr.bf16.mxu0 0
    %243 = vmatpush1.bf16.msra.mxu0 %v217
    %244 = vmatprep.subr.bf16.mxu0 0
    %245 = vmatpush1.bf16.msra.mxu0 %v216
    %246 = vmatprep.subr.bf16.mxu0 0
    %247 = vmatpush1.bf16.msra.mxu0 %v215
    %248 = vmatprep.subr.bf16.mxu0 0
    %249 = vmatpush1.bf16.msra.mxu0 %v214
    %250 = vmatprep.subr.bf16.mxu0 0
    %251 = vmatpush1.bf16.msra.mxu0 %v213
    %252 = vmatprep.subr.bf16.mxu0 0
    %253 = vmatpush1.bf16.msra.mxu0 %v212
    %254 = vmatprep.subr.bf16.mxu0 0
    %255 = vmatpush1.bf16.msra.mxu0 %v211
    %256 = vmatprep.subr.bf16.mxu0 0
    %257 = vmatpush1.bf16.msra.mxu0 %v210
    %258 = vmatprep.subr.bf16.mxu0 0
    %259 = vmatpush2.bf16.msra.mxu0 %v225
    %260 = vmatprep.subr.bf16.mxu0 0
    %261 = vmatpush2.bf16.msra.mxu0 %v224
    %262 = vmatprep.subr.bf16.mxu0 0
    %263 = vmatpush2.bf16.msra.mxu0 %v223
    %264 = vmatprep.subr.bf16.mxu0 0
    %265 = vmatpush2.bf16.msra.mxu0 %v222
    %266 = vmatprep.subr.bf16.mxu0 0
    %267 = vmatpush2.bf16.msra.mxu0 %v221
    %268 = vmatprep.subr.bf16.mxu0 0
    %269 = vmatpush2.bf16.msra.mxu0 %v220
    %270 = vmatprep.subr.bf16.mxu0 0
    %271 = vmatpush2.bf16.msra.mxu0 %v219
    %272 = vmatprep.subr.bf16.mxu0 0
    %273 = vmatpush2.bf16.msra.mxu0 %v218
    %274 = vmatprep.mubr.bf16.mxu0 %v106
    %275 = vmatmul.mubr.bf16.gmra.mxu0 %v105
    %v276 = vpop.f32.mrf.mxu0
    %v277 = vadd.f32 %v144, %v276
    %v278 = vpop.f32.mrf.mxu0
    %v279 = vpop.f32.mrf.mxu0
    %v280 = vpop.f32.mrf.mxu0
    %281 = vdwg.mxu0
    %v282 = vmax.f32 %v277, 0.0
    %v283 = vpack.c.bf16 %v282, %v282
    %v284 = vld [vmem:[#allocation7] sm:$0xf]
    %v285 = vld [vmem:[#allocation7 + $0x4] sm:$0xf]
    %v286 = vld [vmem:[#allocation7 + $0x8] sm:$0xf]
    %v287 = vld [vmem:[#allocation7 + $0xc] sm:$0xf]
    %v288 = vld [vmem:[#allocation7 + $0x10] sm:$0xf]
    %v289 = vld [vmem:[#allocation7 + $0x14] sm:$0xf]
    %v290 = vld [vmem:[#allocation7 + $0x18] sm:$0xf]
    %v291 = vld [vmem:[#allocation7 + $0x1c] sm:$0xf]
    %v292 = vld [vmem:[#allocation7 + $0x20] sm:$0xf]
    %v293 = vld [vmem:[#allocation7 + $0x24] sm:$0xf]
    %v294 = vld [vmem:[#allocation7 + $0x28] sm:$0xf]
    %v295 = vld [vmem:[#allocation7 + $0x2c] sm:$0xf]
    %v296 = vld [vmem:[#allocation7 + $0x30] sm:$0xf]
    %v297 = vld [vmem:[#allocation7 + $0x34] sm:$0xf]
    %v298 = vld [vmem:[#allocation7 + $0x38] sm:$0xf]
    %v299 = vld [vmem:[#allocation7 + $0x3c] sm:$0xf]
    %v300 = vld [vmem:[%s4] sm:$0x1]
    %v302 = vlaneseq
    %v303 = vshrl.u32 %v302, 7
    %v304 = vsub.s32 0, %v303
    %v305 = vrot.slane %v300, %v304
    %v323 = vunpack.c.l.b16 %v284
    %v324 = vunpack.c.l.b16 %v285
    %v325 = vunpack.c.l.b16 %v286
    %v326 = vunpack.c.l.b16 %v287
    %v327 = vunpack.c.l.b16 %v288
    %v328 = vunpack.c.l.b16 %v289
    %v329 = vunpack.c.l.b16 %v290
    %v330 = vunpack.c.l.b16 %v291
    %v331 = vunpack.c.l.b16 %v292
    %v332 = vunpack.c.l.b16 %v293
    %v333 = vunpack.c.l.b16 %v294
    %v334 = vunpack.c.l.b16 %v295
    %v335 = vunpack.c.l.b16 %v296
    %v336 = vunpack.c.l.b16 %v297
    %v337 = vunpack.c.l.b16 %v298
    %v338 = vunpack.c.l.b16 %v299
    %v339 = vpack.c.b16 %v324, %v323
    %v340 = vpack.c.b16 %v326, %v325
    %v341 = vpack.c.b16 %v328, %v327
    %v342 = vpack.c.b16 %v330, %v329
    %v343 = vpack.c.b16 %v332, %v331
    %v344 = vpack.c.b16 %v334, %v333
    %v345 = vpack.c.b16 %v336, %v335
    %v346 = vpack.c.b16 %v338, %v337
    %355 = vmatprep.subr.bf16.mxu0 0
    %356 = vmatpush1.bf16.msra.mxu0 %v346
    %357 = vmatprep.subr.bf16.mxu0 0
    %358 = vmatpush1.bf16.msra.mxu0 %v345
    %359 = vmatprep.subr.bf16.mxu0 0
    %360 = vmatpush1.bf16.msra.mxu0 %v344
    %361 = vmatprep.subr.bf16.mxu0 0
    %362 = vmatpush1.bf16.msra.mxu0 %v343
    %363 = vmatprep.subr.bf16.mxu0 0
    %364 = vmatpush1.bf16.msra.mxu0 %v342
    %365 = vmatprep.subr.bf16.mxu0 0
    %366 = vmatpush1.bf16.msra.mxu0 %v341
    %367 = vmatprep.subr.bf16.mxu0 0
    %368 = vmatpush1.bf16.msra.mxu0 %v340
    %369 = vmatprep.subr.bf16.mxu0 0
    %370 = vmatpush1.bf16.msra.mxu0 %v339
    %371 = vmatprep.subr.bf16.mxu0 0
    %372 = vmatpush2.bf16.msra.mxu0 0
    %373 = vmatprep.subr.bf16.mxu0 0
    %374 = vmatpush2.bf16.msra.mxu0 0
    %375 = vmatprep.subr.bf16.mxu0 0
    %376 = vmatpush2.bf16.msra.mxu0 0
    %377 = vmatprep.subr.bf16.mxu0 0
    %378 = vmatpush2.bf16.msra.mxu0 0
    %379 = vmatprep.subr.bf16.mxu0 0
    %380 = vmatpush2.bf16.msra.mxu0 0
    %381 = vmatprep.subr.bf16.mxu0 0
    %382 = vmatpush2.bf16.msra.mxu0 0
    %383 = vmatprep.subr.bf16.mxu0 0
    %384 = vmatpush2.bf16.msra.mxu0 0
    %385 = vmatprep.subr.bf16.mxu0 0
    %386 = vmatpush2.bf16.msra.mxu0 0
    %387 = vmatprep.mubr.bf16.mxu0 0
    %388 = vmatmul.mubr.bf16.gmra.mxu0 %v283
    %v389 = vpop.f32.mrf.mxu0
    %v390 = vadd.f32 %v305, %v389
    %v391 = vpop.f32.mrf.mxu0
    %v392 = vpop.f32.mrf.mxu0
    %v393 = vpop.f32.mrf.mxu0
    %394 = vdwg.mxu0
    %v395 = vpack.c.bf16 %v390, %v390
    %vm396 = vcmask 519168
    %397 = vst.msk [vmem:[#allocation12] sm:$0xf] %vm396, %v395
    %v398 = vld [vmem:[#allocation8] sm:$0xf]
    %v399 = vld [vmem:[#allocation8 + $0x4] sm:$0xf]
    %v400 = vld [vmem:[#allocation8 + $0x8] sm:$0xf]
    %v401 = vld [vmem:[#allocation8 + $0xc] sm:$0xf]
    %v402 = vld [vmem:[#allocation8 + $0x10] sm:$0xf]
    %v403 = vld [vmem:[#allocation8 + $0x14] sm:$0xf]
    %v404 = vld [vmem:[#allocation8 + $0x18] sm:$0xf]
    %v405 = vld [vmem:[#allocation8 + $0x1c] sm:$0xf]
    %v406 = vld [vmem:[#allocation8 + $0x20] sm:$0xf]
    %v407 = vld [vmem:[#allocation8 + $0x24] sm:$0xf]
    %v408 = vld [vmem:[#allocation8 + $0x28] sm:$0xf]
    %v409 = vld [vmem:[#allocation8 + $0x2c] sm:$0xf]
    %v410 = vld [vmem:[#allocation8 + $0x30] sm:$0xf]
    %v411 = vld [vmem:[#allocation8 + $0x34] sm:$0xf]
    %v412 = vld [vmem:[#allocation8 + $0x38] sm:$0xf]
    %v413 = vld [vmem:[#allocation8 + $0x3c] sm:$0xf]
    %v414 = vld [vmem:[%s6] sm:$0x1]
    %v416 = vlaneseq
    %v417 = vshrl.u32 %v416, 7
    %v418 = vsub.s32 0, %v417
    %v419 = vrot.slane %v414, %v418
    %v437 = vunpack.c.l.b16 %v398
    %v438 = vunpack.c.l.b16 %v399
    %v439 = vunpack.c.l.b16 %v400
    %v440 = vunpack.c.l.b16 %v401
    %v441 = vunpack.c.l.b16 %v402
    %v442 = vunpack.c.l.b16 %v403
    %v443 = vunpack.c.l.b16 %v404
    %v444 = vunpack.c.l.b16 %v405
    %v445 = vunpack.c.l.b16 %v406
    %v446 = vunpack.c.l.b16 %v407
    %v447 = vunpack.c.l.b16 %v408
    %v448 = vunpack.c.l.b16 %v409
    %v449 = vunpack.c.l.b16 %v410
    %v450 = vunpack.c.l.b16 %v411
    %v451 = vunpack.c.l.b16 %v412
    %v452 = vunpack.c.l.b16 %v413
    %v453 = vpack.c.b16 %v438, %v437
    %v454 = vpack.c.b16 %v440, %v439
    %v455 = vpack.c.b16 %v442, %v441
    %v456 = vpack.c.b16 %v444, %v443
    %v457 = vpack.c.b16 %v446, %v445
    %v458 = vpack.c.b16 %v448, %v447
    %v459 = vpack.c.b16 %v450, %v449
    %v460 = vpack.c.b16 %v452, %v451
    %469 = vmatprep.subr.bf16.mxu0 0
    %470 = vmatpush1.bf16.msra.mxu0 %v460
    %471 = vmatprep.subr.bf16.mxu0 0
    %472 = vmatpush1.bf16.msra.mxu0 %v459
    %473 = vmatprep.subr.bf16.mxu0 0
    %474 = vmatpush1.bf16.msra.mxu0 %v458
    %475 = vmatprep.subr.bf16.mxu0 0
    %476 = vmatpush1.bf16.msra.mxu0 %v457
    %477 = vmatprep.subr.bf16.mxu0 0
    %478 = vmatpush1.bf16.msra.mxu0 %v456
    %479 = vmatprep.subr.bf16.mxu0 0
    %480 = vmatpush1.bf16.msra.mxu0 %v455
    %481 = vmatprep.subr.bf16.mxu0 0
    %482 = vmatpush1.bf16.msra.mxu0 %v454
    %483 = vmatprep.subr.bf16.mxu0 0
    %484 = vmatpush1.bf16.msra.mxu0 %v453
    %485 = vmatprep.subr.bf16.mxu0 0
    %486 = vmatpush2.bf16.msra.mxu0 0
    %487 = vmatprep.subr.bf16.mxu0 0
    %488 = vmatpush2.bf16.msra.mxu0 0
    %489 = vmatprep.subr.bf16.mxu0 0
    %490 = vmatpush2.bf16.msra.mxu0 0
    %491 = vmatprep.subr.bf16.mxu0 0
    %492 = vmatpush2.bf16.msra.mxu0 0
    %493 = vmatprep.subr.bf16.mxu0 0
    %494 = vmatpush2.bf16.msra.mxu0 0
    %495 = vmatprep.subr.bf16.mxu0 0
    %496 = vmatpush2.bf16.msra.mxu0 0
    %497 = vmatprep.subr.bf16.mxu0 0
    %498 = vmatpush2.bf16.msra.mxu0 0
    %499 = vmatprep.subr.bf16.mxu0 0
    %500 = vmatpush2.bf16.msra.mxu0 0
    %501 = vmatprep.mubr.bf16.mxu0 0
    %502 = vmatmul.mubr.bf16.gmra.mxu0 %v395
    %v503 = vpop.f32.mrf.mxu0
    %v504 = vadd.f32 %v419, %v503
    %v505 = vpop.f32.mrf.mxu0
    %v506 = vpop.f32.mrf.mxu0
    %v507 = vpop.f32.mrf.mxu0
    %508 = vdwg.mxu0
    %v509 = vmax.f32 %v504, 0.0
    %v510 = vpack.c.bf16 %v509, %v509
    %v511 = vld [vmem:[#allocation10] sm:$0xff]
    %v512 = vld [vmem:[#allocation10 + $0x8] sm:$0xff]
    %v513 = vld [vmem:[#allocation10 + $0x10] sm:$0xff]
    %v514 = vld [vmem:[#allocation10 + $0x18] sm:$0xff]
    %v515 = vld [vmem:[#allocation10 + $0x20] sm:$0xff]
    %v516 = vld [vmem:[#allocation10 + $0x28] sm:$0xff]
    %v517 = vld [vmem:[#allocation10 + $0x30] sm:$0xff]
    %v518 = vld [vmem:[#allocation10 + $0x38] sm:$0xff]
    %v519 = vld [vmem:[#allocation10 + $0x40] sm:$0xff]
    %v520 = vld [vmem:[#allocation10 + $0x48] sm:$0xff]
    %v521 = vld [vmem:[#allocation10 + $0x50] sm:$0xff]
    %v522 = vld [vmem:[#allocation10 + $0x58] sm:$0xff]
    %v523 = vld [vmem:[#allocation10 + $0x60] sm:$0xff]
    %v524 = vld [vmem:[#allocation10 + $0x68] sm:$0xff]
    %v525 = vld [vmem:[#allocation10 + $0x70] sm:$0xff]
    %v526 = vld [vmem:[#allocation10 + $0x78] sm:$0xff]
    %v527 = vld [vmem:[%s8] sm:$0x3]
    %v529 = vlaneseq
    %v530 = vshrl.u32 %v529, 7
    %v531 = vsub.s32 0, %v530
    %v532 = vrot.slane %v527, %v531
    %v533 = vlaneseq
    %v534 = vshrl.u32 %v533, 7
    %v535 = vsub.s32 1, %v534
    %v536 = vrot.slane %v527, %v535
    %v555 = vunpack.c.l.b16 %v511
    %v556 = vunpack.c.h.b16 %v511
    %v557 = vunpack.c.l.b16 %v512
    %v558 = vunpack.c.h.b16 %v512
    %v559 = vunpack.c.l.b16 %v513
    %v560 = vunpack.c.h.b16 %v513
    %v561 = vunpack.c.l.b16 %v514
    %v562 = vunpack.c.h.b16 %v514
    %v563 = vunpack.c.l.b16 %v515
    %v564 = vunpack.c.h.b16 %v515
    %v565 = vunpack.c.l.b16 %v516
    %v566 = vunpack.c.h.b16 %v516
    %v567 = vunpack.c.l.b16 %v517
    %v568 = vunpack.c.h.b16 %v517
    %v569 = vunpack.c.l.b16 %v518
    %v570 = vunpack.c.h.b16 %v518
    %v571 = vunpack.c.l.b16 %v519
    %v572 = vunpack.c.h.b16 %v519
    %v573 = vunpack.c.l.b16 %v520
    %v574 = vunpack.c.h.b16 %v520
    %v575 = vunpack.c.l.b16 %v521
    %v576 = vunpack.c.h.b16 %v521
    %v577 = vunpack.c.l.b16 %v522
    %v578 = vunpack.c.h.b16 %v522
    %v579 = vunpack.c.l.b16 %v523
    %v580 = vunpack.c.h.b16 %v523
    %v581 = vunpack.c.l.b16 %v524
    %v582 = vunpack.c.h.b16 %v524
    %v583 = vunpack.c.l.b16 %v525
    %v584 = vunpack.c.h.b16 %v525
    %v585 = vunpack.c.l.b16 %v526
    %v586 = vunpack.c.h.b16 %v526
    %v587 = vpack.c.b16 %v557, %v555
    %v588 = vpack.c.b16 %v558, %v556
    %v589 = vpack.c.b16 %v561, %v559
    %v590 = vpack.c.b16 %v562, %v560
    %v591 = vpack.c.b16 %v565, %v563
    %v592 = vpack.c.b16 %v566, %v564
    %v593 = vpack.c.b16 %v569, %v567
    %v594 = vpack.c.b16 %v570, %v568
    %v595 = vpack.c.b16 %v573, %v571
    %v596 = vpack.c.b16 %v574, %v572
    %v597 = vpack.c.b16 %v577, %v575
    %v598 = vpack.c.b16 %v578, %v576
    %v599 = vpack.c.b16 %v581, %v579
    %v600 = vpack.c.b16 %v582, %v580
    %v601 = vpack.c.b16 %v585, %v583
    %v602 = vpack.c.b16 %v586, %v584
    %619 = vmatprep.subr.bf16.mxu0 %v602
    %620 = vmatpush1.bf16.msra.mxu0 %v601
    %621 = vmatprep.subr.bf16.mxu0 %v600
    %622 = vmatpush1.bf16.msra.mxu0 %v599
    %623 = vmatprep.subr.bf16.mxu0 %v598
    %624 = vmatpush1.bf16.msra.mxu0 %v597
    %625 = vmatprep.subr.bf16.mxu0 %v596
    %626 = vmatpush1.bf16.msra.mxu0 %v595
    %627 = vmatprep.subr.bf16.mxu0 %v594
    %628 = vmatpush1.bf16.msra.mxu0 %v593
    %629 = vmatprep.subr.bf16.mxu0 %v592
    %630 = vmatpush1.bf16.msra.mxu0 %v591
    %631 = vmatprep.subr.bf16.mxu0 %v590
    %632 = vmatpush1.bf16.msra.mxu0 %v589
    %633 = vmatprep.subr.bf16.mxu0 %v588
    %634 = vmatpush1.bf16.msra.mxu0 %v587
    %635 = vmatprep.subr.bf16.mxu0 0
    %636 = vmatpush2.bf16.msra.mxu0 0
    %637 = vmatprep.subr.bf16.mxu0 0
    %638 = vmatpush2.bf16.msra.mxu0 0
    %639 = vmatprep.subr.bf16.mxu0 0
    %640 = vmatpush2.bf16.msra.mxu0 0
    %641 = vmatprep.subr.bf16.mxu0 0
    %642 = vmatpush2.bf16.msra.mxu0 0
    %643 = vmatprep.subr.bf16.mxu0 0
    %644 = vmatpush2.bf16.msra.mxu0 0
    %645 = vmatprep.subr.bf16.mxu0 0
    %646 = vmatpush2.bf16.msra.mxu0 0
    %647 = vmatprep.subr.bf16.mxu0 0
    %648 = vmatpush2.bf16.msra.mxu0 0
    %649 = vmatprep.subr.bf16.mxu0 0
    %650 = vmatpush2.bf16.msra.mxu0 0
    %651 = vmatprep.mubr.bf16.mxu0 0
    %652 = vmatmul.mubr.bf16.gmra.mxu0 %v510
    %v653 = vpop.f32.mrf.mxu0
    %v654 = vadd.f32 %v532, %v653
    %v655 = vpop.f32.mrf.mxu0
    %v656 = vadd.f32 %v536, %v655
    %v657 = vpop.f32.mrf.mxu0
    %v658 = vpop.f32.mrf.mxu0
    %659 = vdwg.mxu0
    %v660 = vpack.c.bf16 %v654, %v654
    %v661 = vpack.c.bf16 %v656, %v656
    %v664 = vunpack.c.l.b16 %v660
    %v665 = vunpack.c.l.b16 %v661
    %v666 = vpack.c.b16 %v665, %v664
    %668 = vst [vmem:[#allocation11] sm:$0xff] %v666
    // Predicated region
    $region58: #{tpu_custom_call.1} parent=1 // pred_check
      _
    $region59: #{tpu_custom_call.1} parent=1 // pred_check_branch
      %670 = sbr.rel (0) target = $region61
    $region60: #{tpu_custom_call.1} parent=1 // pred_region
      %s672 = ssub.s32 128, 128
      %673 = vsyncadd [#allocation4], %s672
      %s675 = sshll.u32 [#allocation11], 4
      %s676 = int_to_ptr.vmem [resolvable:$true] %s675
      %678 = dma.vmem_to_hbm [thread:$0]  %s676, 128, %s9, [#allocation4]
    $region61: #{tpu_custom_call.1} parent=1 // pred_fallthru
      _
    // Predicated region
    $region62: #{tpu_custom_call.1} parent=1 // pred_check
      _
    $region63: #{tpu_custom_call.1} parent=1 // pred_check_branch
      %680 = sbr.rel (0) target = $region65
    $region64: #{tpu_custom_call.1} parent=1 // pred_region
      %s682 = ssub.s32 64, 64
      %683 = vsyncadd [#allocation13], %s682
      %s685 = sshll.u32 [#allocation12], 4
      %s686 = int_to_ptr.vmem [resolvable:$true] %s685
      %688 = dma.vmem_to_hbm [thread:$0]  %s686, 64, %s10, [#allocation13]
    $region65: #{tpu_custom_call.1} parent=1 // pred_fallthru
      _
    // Predicated region
    $region66: #{tpu_custom_call.1} parent=1 // pred_check
      _
    $region67: #{tpu_custom_call.1} parent=1 // pred_check_branch
      %690 = sbr.rel (0) target = $region69
    $region68: #{tpu_custom_call.1} parent=1 // pred_region
      %691 = dma.done [#allocation4], 128
    $region69: #{tpu_custom_call.1} parent=1 // pred_fallthru
      _
    // Predicated region
    $region70: #{tpu_custom_call.1} parent=1 // pred_check
      _
    $region71: #{tpu_custom_call.1} parent=1 // pred_check_branch
      %693 = sbr.rel (0) target = $region73
    $region72: #{tpu_custom_call.1} parent=1 // pred_region
      %694 = dma.done [#allocation13], 64
    $region73: #{tpu_custom_call.1} parent=1 // pred_fallthru
      _
    %695 = vsyncpa [#allocation3], 1
    %696 = vsyncpa [#allocation6], 1
    %697 = vsyncpa [#allocation9], 1
    %698 = vsyncpa [#allocation4], 1
    %699 = vsyncpa [#allocation13], 1

</llo_original>
